<compile_context>
chip_gen: v7x
topology: tpu7x:2x2x1
jax: 0.10.0
libtpu: 0.0.40
codegen_flags: <defaults>
</compile_context>

<pallas_src>
import jax
import jax.numpy as jnp
import numpy as np
from jax import lax
from jax.experimental import pallas as pl
from jax.experimental.pallas import tpu as pltpu

LANE = 128
TARGET_BLOCK_ROWS = 2048   # 2048 x 128 f32 = 1 MiB per input block


def _sublanes_for(dtype) -> int:
    # sublane packing per vreg: f32 -> 8 rows, bf16 -> 16, int8/fp8 -> 32
    itemsize = jnp.dtype(dtype).itemsize
    return max(8, 8 * (4 // max(1, itemsize)))


def _make_dice_kernel(block_rows, n_valid, needs_mask, apply_sigmoid):
    """grid = (B, K); axis 0 = image, axis 1 = reduction chunks over rows."""

    def kernel(p_ref, t_ref, out_ref, inter_acc, denom_acc):
        k = pl.program_id(1)
        nk = pl.num_programs(1)

        # Reset per-image partial-sum accumulators at the start of each image.
        @pl.when(k == 0)
        def _():
            inter_acc[...] = jnp.zeros_like(inter_acc)
            denom_acc[...] = jnp.zeros_like(denom_acc)

        # (block_rows, LANE) tile, native dtype in HBM/VMEM, accumulate in f32.
        p = p_ref[...].astype(jnp.float32)
        t = t_ref[...].astype(jnp.float32)
        if apply_sigmoid:
            p = 1.0 / (1.0 + jnp.exp(-p))   # logits -> probs (EUP, ~free vs DMA)

        if needs_mask:
            # Neutralize padded / out-of-range elements (sigmoid(0) = 0.5, and a
            # ragged final block may contain unspecified data).
            row = lax.broadcasted_iota(jnp.int32, (block_rows, LANE), 0)
            lane = lax.broadcasted_iota(jnp.int32, (block_rows, LANE), 1)
            idx = (k * block_rows + row) * LANE + lane
            valid = idx < n_valid
            p = jnp.where(valid, p, 0.0)
            t = jnp.where(valid, t, 0.0)

        # vreg-shaped (8, LANE) partial sums: pure VPU adds per step; the
        # expensive cross-lane reduce happens once per image below.
        pr = p.reshape(block_rows // 8, 8, LANE)
        tr = t.reshape(block_rows // 8, 8, LANE)
        inter_acc[...] += jnp.sum(pr * tr, axis=0)
        denom_acc[...] += jnp.sum(pr + tr, axis=0)   # psum + tsum folded together

        # Finalize this image: per-image dice term into its output block.
        @pl.when(k == nk - 1)
        def _():
            smooth = 1.0
            inter = jnp.sum(inter_acc[...])
            denom = jnp.sum(denom_acc[...])
            a = 1.0 - (2.0 * inter + smooth) / (denom + smooth)
            out_ref[...] = jnp.full(out_ref.shape, a, dtype=out_ref.dtype)

    return kernel


def soft_dice_per_image_with_logits_loss(prediction, target, apply_sigmoid=True):
    """Pallas TPU soft-dice-per-image loss on logits. Inputs: (B, ...) arrays
    (any dtype); returns a float32 scalar."""
    B = prediction.shape[0]
    p = prediction.reshape(B, -1)   # keep native dtype (no HBM-side f32 copy)
    t = target.reshape(B, -1)
    N = p.shape[1]

    # Pad flattened axis only to the (sublane x 128) boundary (small), never to
    # a full block; ragged/padded tails are masked inside the kernel.
    sub = max(_sublanes_for(p.dtype), _sublanes_for(t.dtype))
    pad = (-N) % (LANE * sub)
    if pad:
        p = jnp.pad(p, ((0, 0), (0, pad)))
        t = jnp.pad(t, ((0, 0), (0, pad)))
    R = (N + pad) // LANE
    p = p.reshape(B, R, LANE)
    t = t.reshape(B, R, LANE)

    block_rows = min(TARGET_BLOCK_ROWS, R)          # multiple of `sub` by construction
    grid_k = pl.cdiv(R, block_rows)
    # Mask needed whenever blocks cover elements beyond the original N.
    needs_mask = (grid_k * block_rows * LANE) != N

    kernel = _make_dice_kernel(block_rows, N, needs_mask, apply_sigmoid)

    out = pl.pallas_call(
        kernel,
        out_shape=jax.ShapeDtypeStruct((B, 1, LANE), jnp.float32),
        grid_spec=pltpu.PrefetchScalarGridSpec(
            num_scalar_prefetch=0,
            grid=(B, grid_k),
            in_specs=[
                pl.BlockSpec((pl.Squeezed(), block_rows, LANE),
                             lambda b, k: (b, k, 0)),
                pl.BlockSpec((pl.Squeezed(), block_rows, LANE),
                             lambda b, k: (b, k, 0)),
            ],
            out_specs=pl.BlockSpec((pl.Squeezed(), 1, LANE),
                                   lambda b, k: (b, 0, 0)),
            scratch_shapes=[
                pltpu.VMEM((8, LANE), jnp.float32),   # intersection partial sums
                pltpu.VMEM((8, LANE), jnp.float32),   # (pred + target) partial sums
            ],
        ),
        compiler_params=pltpu.CompilerParams(
            # batch axis is independent across images -> parallel (2 TCs on v7x);
            # reduction axis is sequential -> arbitrary.
            dimension_semantics=("parallel", "arbitrary"),
            vmem_limit_bytes=32 * 1024 * 1024),
    )(p, t)

    # Tiny final mean over B per-image dice terms (done in the wrapper).
    return jnp.mean(out[:, 0, 0])


def _reference(prediction, target):
    smooth = 1.0
    B = prediction.shape[0]
    iflat = jax.nn.sigmoid(prediction.reshape(B, -1).astype(jnp.float32))
    tflat = target.reshape(B, -1).astype(jnp.float32)
    inter = jnp.sum(iflat * tflat, axis=1)
    a = 1.0 - (2.0 * inter + smooth) / (
        jnp.sum(iflat, axis=1) + jnp.sum(tflat, axis=1) + smooth)
    return jnp.mean(a)


if __name__ == "__main__":
    key = jax.random.PRNGKey(0)
    k0, k1, k2 = jax.random.split(key, 3)

    def run_case(k, shape, p_dtype):
        ka, kb = jax.random.split(k)
        logits = jax.random.normal(ka, shape, dtype=jnp.float32).astype(p_dtype)
        target = (jax.random.uniform(kb, shape) > 0.5).astype(jnp.float32)
        got = jax.block_until_ready(
            soft_dice_per_image_with_logits_loss(logits, target))
        want = jax.block_until_ready(_reference(logits, target))
        np.testing.assert_allclose(np.asarray(got), np.asarray(want),
                                   rtol=2e-5, atol=2e-5)

    # primary case: B=2, C=4, 16x16 (N=1024, fully aligned path)
    run_case(k0, (2, 4, 16, 16), jnp.float32)
    # unaligned N (element mask path) with bf16 logits kept narrow in HBM
    run_case(k1, (2, 3, 20, 20), jnp.bfloat16)
    # multi-step reduction with a ragged final block (R=2560 > 2048)
    run_case(k2, (1, 5, 256, 256), jnp.float32)

    print("KERNEL_OK")
</pallas_src>

<mosaic_0001>
module attributes {stable_mosaic.version = 11 : i64} {
  func.func @kernel(%arg0: i32, %arg1: i32, %arg2: memref<1x8x128xf32, #tpu.memory_space<vmem>>, %arg3: memref<1x8x128xf32, #tpu.memory_space<vmem>>, %arg4: memref<1x1x128xf32, #tpu.memory_space<vmem>>, %arg5: memref<8x128xf32, #tpu.memory_space<vmem>>, %arg6: memref<8x128xf32, #tpu.memory_space<vmem>>) attributes {dimension_semantics = [#tpu.dimension_semantics<parallel>, #tpu.dimension_semantics<arbitrary>], iteration_bounds = array<i64: 2, 1>, scalar_prefetch = 0 : i64, scratch_operands = 2 : i64, tpu.core_type = #tpu.core_type<tc>, window_params = [{transform_indices = @transform_0, window_bounds = array<i64: 1, 8, 128>}, {transform_indices = @transform_1, window_bounds = array<i64: 1, 8, 128>}, {transform_indices = @transform_2, window_bounds = array<i64: 1, 1, 128>}]} {
    %c0_i32 = arith.constant 0 : i32
    %0 = arith.cmpi eq, %arg1, %c0_i32 : i32
    %1 = arith.extui %0 : i1 to i32
    %c0_i32_0 = arith.constant 0 : i32
    %2 = arith.cmpi ne, %1, %c0_i32_0 : i32
    scf.if %2 {
      %cst_20 = arith.constant 0.000000e+00 : f32
      %29 = vector.broadcast %cst_20 : f32 to vector<8x128xf32>
      %c0_21 = arith.constant 0 : index
      %c0_22 = arith.constant 0 : index
      %30 = vector.load %arg5[%c0_21, %c0_22] : memref<8x128xf32, #tpu.memory_space<vmem>>, vector<8x128xf32>
      tpu.vector_store %arg5[%c0_21, %c0_22], %29 {strides = array<i32>} : memref<8x128xf32, #tpu.memory_space<vmem>>, vector<8x128xf32>,
      %cst_23 = arith.constant 0.000000e+00 : f32
      %31 = vector.broadcast %cst_23 : f32 to vector<8x128xf32>
      %c0_24 = arith.constant 0 : index
      %c0_25 = arith.constant 0 : index
      %32 = vector.load %arg6[%c0_24, %c0_25] : memref<8x128xf32, #tpu.memory_space<vmem>>, vector<8x128xf32>
      tpu.vector_store %arg6[%c0_24, %c0_25], %31 {strides = array<i32>} : memref<8x128xf32, #tpu.memory_space<vmem>>, vector<8x128xf32>,
    } else {
    }
    %c0 = arith.constant 0 : index
    %c0_1 = arith.constant 0 : index
    %c0_2 = arith.constant 0 : index
    %3 = vector.load %arg2[%c0, %c0_1, %c0_2] : memref<1x8x128xf32, #tpu.memory_space<vmem>>, vector<1x8x128xf32>
    %4 = vector.shape_cast %3 : vector<1x8x128xf32> to vector<8x128xf32>
    %c0_3 = arith.constant 0 : index
    %c0_4 = arith.constant 0 : index
    %c0_5 = arith.constant 0 : index
    %5 = vector.load %arg3[%c0_3, %c0_4, %c0_5] : memref<1x8x128xf32, #tpu.memory_space<vmem>>, vector<1x8x128xf32>
    %6 = vector.shape_cast %5 : vector<1x8x128xf32> to vector<8x128xf32>
    %cst = arith.constant 0.000000e+00 : f32
    %7 = vector.broadcast %cst : f32 to vector<8x128xf32>
    %8 = arith.subf %7, %4 : vector<8x128xf32>
    %9 = math.exp %8 : vector<8x128xf32>
    %cst_6 = arith.constant 1.000000e+00 : f32
    %10 = vector.broadcast %cst_6 : f32 to vector<8x128xf32>
    %11 = arith.addf %10, %9 : vector<8x128xf32>
    %cst_7 = arith.constant 1.000000e+00 : f32
    %12 = vector.broadcast %cst_7 : f32 to vector<8x128xf32>
    %13 = arith.divf %12, %11 : vector<8x128xf32>
    %14 = vector.shape_cast %13 : vector<8x128xf32> to vector<1x8x128xf32>
    %15 = vector.shape_cast %6 : vector<8x128xf32> to vector<1x8x128xf32>
    %c0_8 = arith.constant 0 : index
    %c0_9 = arith.constant 0 : index
    %16 = vector.load %arg5[%c0_8, %c0_9] : memref<8x128xf32, #tpu.memory_space<vmem>>, vector<8x128xf32>
    %17 = arith.mulf %14, %15 : vector<1x8x128xf32>
    %cst_10 = arith.constant dense<0.000000e+00> : vector<8x128xf32>
    %18 = vector.multi_reduction <add>, %17, %cst_10 [0] : vector<1x8x128xf32> to vector<8x128xf32>
    %19 = arith.addf %16, %18 : vector<8x128xf32>
    %c0_11 = arith.constant 0 : index
    %c0_12 = arith.constant 0 : index
    %20 = vector.load %arg5[%c0_11, %c0_12] : memref<8x128xf32, #tpu.memory_space<vmem>>, vector<8x128xf32>
    tpu.vector_store %arg5[%c0_11, %c0_12], %19 {strides = array<i32>} : memref<8x128xf32, #tpu.memory_space<vmem>>, vector<8x128xf32>,
    %c0_13 = arith.constant 0 : index
    %c0_14 = arith.constant 0 : index
    %21 = vector.load %arg6[%c0_13, %c0_14] : memref<8x128xf32, #tpu.memory_space<vmem>>, vector<8x128xf32>
    %22 = arith.addf %14, %15 : vector<1x8x128xf32>
    %cst_15 = arith.constant dense<0.000000e+00> : vector<8x128xf32>
    %23 = vector.multi_reduction <add>, %22, %cst_15 [0] : vector<1x8x128xf32> to vector<8x128xf32>
    %24 = arith.addf %21, %23 : vector<8x128xf32>
    %c0_16 = arith.constant 0 : index
    %c0_17 = arith.constant 0 : index
    %25 = vector.load %arg6[%c0_16, %c0_17] : memref<8x128xf32, #tpu.memory_space<vmem>>, vector<8x128xf32>
    tpu.vector_store %arg6[%c0_16, %c0_17], %24 {strides = array<i32>} : memref<8x128xf32, #tpu.memory_space<vmem>>, vector<8x128xf32>,
    %c0_i32_18 = arith.constant 0 : i32
    %26 = arith.cmpi eq, %arg1, %c0_i32_18 : i32
    %27 = arith.extui %26 : i1 to i32
    %c0_i32_19 = arith.constant 0 : i32
    %28 = arith.cmpi ne, %27, %c0_i32_19 : i32
    scf.if %28 {
      %c0_20 = arith.constant 0 : index
      %c0_21 = arith.constant 0 : index
      %29 = vector.load %arg5[%c0_20, %c0_21] : memref<8x128xf32, #tpu.memory_space<vmem>>, vector<8x128xf32>
      %30 = vector.shape_cast %29 : vector<8x128xf32> to vector<1x8x128xf32>
      %cst_22 = arith.constant dense<0.000000e+00> : vector<1xf32>
      %31 = vector.multi_reduction <add>, %30, %cst_22 [1, 2] : vector<1x8x128xf32> to vector<1xf32>
      %32 = vector.shape_cast %31 : vector<1xf32> to vector<1x1x1xf32>
      %33 = vector.extract %32[0, 0, 0] : f32 from vector<1x1x1xf32>
      %c0_23 = arith.constant 0 : index
      %c0_24 = arith.constant 0 : index
      %34 = vector.load %arg6[%c0_23, %c0_24] : memref<8x128xf32, #tpu.memory_space<vmem>>, vector<8x128xf32>
      %35 = vector.shape_cast %34 : vector<8x128xf32> to vector<1x8x128xf32>
      %cst_25 = arith.constant dense<0.000000e+00> : vector<1xf32>
      %36 = vector.multi_reduction <add>, %35, %cst_25 [1, 2] : vector<1x8x128xf32> to vector<1xf32>
      %37 = vector.shape_cast %36 : vector<1xf32> to vector<1x1x1xf32>
      %38 = vector.extract %37[0, 0, 0] : f32 from vector<1x1x1xf32>
      %cst_26 = arith.constant 2.000000e+00 : f32
      %39 = arith.mulf %cst_26, %33 : f32
      %cst_27 = arith.constant 1.000000e+00 : f32
      %40 = arith.addf %39, %cst_27 : f32
      %cst_28 = arith.constant 1.000000e+00 : f32
      %41 = arith.addf %38, %cst_28 : f32
      %42 = arith.divf %40, %41 : f32
      %cst_29 = arith.constant 1.000000e+00 : f32
      %43 = arith.subf %cst_29, %42 : f32
      %44 = vector.broadcast %43 : f32 to vector<1x128xf32>
      %c0_30 = arith.constant 0 : index
      %c0_31 = arith.constant 0 : index
      %c0_32 = arith.constant 0 : index
      %45 = vector.load %arg4[%c0_30, %c0_31, %c0_32] : memref<1x1x128xf32, #tpu.memory_space<vmem>>, vector<1x1x128xf32>
      %46 = vector.shape_cast %45 : vector<1x1x128xf32> to vector<1x128xf32>
      %47 = vector.shape_cast %44 : vector<1x128xf32> to vector<1x1x128xf32>
      tpu.vector_store %arg4[%c0_30, %c0_31, %c0_32], %47 {strides = array<i32>} : memref<1x1x128xf32, #tpu.memory_space<vmem>>, vector<1x1x128xf32>,
    } else {
    }
    return
  }
  func.func @transform_0(%arg0: i32, %arg1: i32) -> (i32, i32, i32) {
    %c0_i32 = arith.constant 0 : i32
    %c0_i32_0 = arith.constant 0 : i32
    return %arg0, %arg1, %c0_i32 : i32, i32, i32
  }
  func.func @transform_1(%arg0: i32, %arg1: i32) -> (i32, i32, i32) {
    %c0_i32 = arith.constant 0 : i32
    %c0_i32_0 = arith.constant 0 : i32
    return %arg0, %arg1, %c0_i32 : i32, i32, i32
  }
  func.func @transform_2(%arg0: i32, %arg1: i32) -> (i32, i32, i32) {
    %c0_i32 = arith.constant 0 : i32
    %c0_i32_0 = arith.constant 0 : i32
    %c0_i32_1 = arith.constant 0 : i32
    return %arg0, %c0_i32, %c0_i32_0 : i32, i32, i32
  }
}

</mosaic_0001>

<llo_original>
// kernel: tpu_custom_call.1
$region0: #{tpu_custom_call.1}
  #allocation0 [shape = 'u32[]', space=smem, size = 0x4, offset = 0x4, fixed_abs, tag = 'smem constant byte address 0x4 - core index']
  #allocation1 [shape = 'u32[144,128]{1,0:T(1,128)}', space=vmem, size = 0x12000, scoped, tag = 'internal scratch']
  #allocation2 [shape = 'f32[8,128]{1,0:T(8,128)}', space=vmem, size = 0x1000, scoped, tag = 'scratch operand']
  #allocation3 [shape = 'f32[8,128]{1,0:T(8,128)}', space=vmem, size = 0x1000, scoped, tag = 'scratch operand']
  %s0 = inlined_call_operand.hbm [shape: f32[2,8,128], index: 0, kind: input, shape index: {}]
  %s1 = inlined_call_operand.hbm [shape: f32[2,8,128], index: 1, kind: input, shape index: {}]
  %s2 = inlined_call_operand.hbm [shape: f32[2,1,128], index: 2, kind: output, shape index: {}]
  %s3 = sld [smem:[#allocation0]]
  $region57: #{tpu_custom_call.1} parent=0
    _
  %s5 = ssub.s32 1, %s3
  %s6 = scalar_select 0, %s5, %s3
  $region1: #{tpu_custom_call.1} parent=0
    #allocation4 [shape = 'u8[8192]{0}', space=vmem, size = 0x2000, scoped, tag = 'input window, operand 0']
    #allocation5 [shape = 's32[2]{0}', space=sflag, size = 0x8, scoped, tag = 'scoped memory for tpu_custom_call.1']
    #allocation6 [shape = 's32[2]{0}', space=sflag, size = 0x8, scoped, tag = 'scoped memory for tpu_custom_call.1']
    #allocation7 [shape = 'u8[8192]{0}', space=vmem, size = 0x2000, scoped, tag = 'input window, operand 1']
    #allocation8 [shape = 's32[2]{0}', space=sflag, size = 0x8, scoped, tag = 'scoped memory for tpu_custom_call.1']
    #allocation9 [shape = 'u8[1024]{0}', space=vmem, size = 0x400, scoped, tag = 'output window, operand 0']
    %7 = vsyncpa [#allocation5], 0
    %s8 = scalar_lea.sflag [#allocation5], 1
    %9 = vsyncpa %s8, 0
    %10 = vsyncpa [#allocation8], 0
    %s11 = scalar_lea.sflag [#allocation8], 1
    %12 = vsyncpa %s11, 0
    %13 = vsyncpa [#allocation6], 0
    %s14 = scalar_lea.sflag [#allocation6], 1
    %15 = vsyncpa %s14, 0
    loop: start=0, step=1, limit=4
    $region2: #{tpu_custom_call.1} parent=1 // loop_pre_header
      _
    $region3: #{tpu_custom_call.1} parent=1 // loop_header
      %s17 = sphi 0, %s21
      %p18 = scmp.ge.s32.totalorder %s17, 4
      %s24 = sphi 0, %s36
      %s25 = sphi 0, %s32
      %s26 = sphi 0, %s24
      %s27 = sphi 0, %s25
      %s28 = sphi 0, %s26
      %s29 = sphi 0, %s27
      %s41 = sphi 0, %s43
      %s44 = sphi 0, %s41
      %s45 = sphi 0, %s44
      %s61 = sphi 0, %s45
      %s69 = sphi 0, %s71
      %s72 = sphi 0, %s69
      %s73 = sphi 0, %s72
      %s89 = sphi 0, %s73
      %s95 = sphi 0, %s97
      %s98 = sphi 0, %s95
      %s99 = sphi 0, %s98
      %s115 = sphi 0, %s99
    $region4: #{tpu_custom_call.1} parent=1 // loop_header_branch
      %20 = sbr.rel (%p18) target = $region8
    $region5: #{tpu_custom_call.1} parent=1 // loop_body
      %s22 = ssub.s32 %s17, 1
      %s23 = ssub.s32 %s17, 2
      %s30 = sadd.s32 1, %s25
      %p31 = scmp.ge.s32.totalorder %s30, 1
      %s32 = scalar_select %p31, 0, %s30
      %s33 = sadd.s32 1, %s24
      %s34 = scalar_select %p31, %s33, %s24
      %p35 = scmp.ge.s32.totalorder %s34, 2
      %s36 = scalar_select %p35, 0, %s34
      %s37 = ssub.s32 %s24, %s36
      %s38 = ssub.s32 %s25, %s32
      %s39 = sor.u32 %s37, %s38
      %p40 = scmp.eq.s32.totalorder %s39, 0
      %s42 = sadd.s32 %s41, 1
      %s43 = scalar_select %p40, %s41, %s42
      %p46 = pneg %p40
      %p47 = scmp.eq.s32.totalorder %s17, 1
      %p48 = por %p46, %p47
      %p49 = scmp.ne.s32.totalorder %s41, %s44
      %p50 = scmp.eq.s32.totalorder %s17, 0
      %p51 = por %p49, %p50
      %p52 = scmp.ne.s32.totalorder %s41, %s44
      %p53 = scmp.eq.s32.totalorder %s22, 1
      %p54 = por %p52, %p53
      %p55 = scmp.ne.s32.totalorder %s44, %s45
      %p56 = scmp.eq.s32.totalorder %s22, 0
      %p57 = por %p55, %p56
      %p58 = scmp.ne.s32.totalorder %s44, %s45
      %p59 = scmp.eq.s32.totalorder %s23, 1
      %p60 = por %p58, %p59
      %p62 = scmp.ne.s32.totalorder %s45, %s61
      %p63 = scmp.eq.s32.totalorder %s23, 0
      %p64 = por %p62, %p63
      %s65 = ssub.s32 %s24, %s36
      %s66 = ssub.s32 %s25, %s32
      %s67 = sor.u32 %s65, %s66
      %p68 = scmp.eq.s32.totalorder %s67, 0
      %s70 = sadd.s32 %s69, 1
      %s71 = scalar_select %p68, %s69, %s70
      %p74 = pneg %p68
      %p75 = scmp.eq.s32.totalorder %s17, 1
      %p76 = por %p74, %p75
      %p77 = scmp.ne.s32.totalorder %s69, %s72
      %p78 = scmp.eq.s32.totalorder %s17, 0
      %p79 = por %p77, %p78
      %p80 = scmp.ne.s32.totalorder %s69, %s72
      %p81 = scmp.eq.s32.totalorder %s22, 1
      %p82 = por %p80, %p81
      %p83 = scmp.ne.s32.totalorder %s72, %s73
      %p84 = scmp.eq.s32.totalorder %s22, 0
      %p85 = por %p83, %p84
      %p86 = scmp.ne.s32.totalorder %s72, %s73
      %p87 = scmp.eq.s32.totalorder %s23, 1
      %p88 = por %p86, %p87
      %p90 = scmp.ne.s32.totalorder %s73, %s89
      %p91 = scmp.eq.s32.totalorder %s23, 0
      %p92 = por %p90, %p91
      %s93 = ssub.s32 %s24, %s36
      %p94 = scmp.eq.s32.totalorder %s93, 0
      %s96 = sadd.s32 %s95, 1
      %s97 = scalar_select %p94, %s95, %s96
      %p100 = pneg %p94
      %p101 = scmp.eq.s32.totalorder %s17, 1
      %p102 = por %p100, %p101
      %p103 = scmp.ne.s32.totalorder %s95, %s98
      %p104 = scmp.eq.s32.totalorder %s17, 0
      %p105 = por %p103, %p104
      %p106 = scmp.ne.s32.totalorder %s95, %s98
      %p107 = scmp.eq.s32.totalorder %s22, 1
      %p108 = por %p106, %p107
      %p109 = scmp.ne.s32.totalorder %s98, %s99
      %p110 = scmp.eq.s32.totalorder %s22, 0
      %p111 = por %p109, %p110
      %p112 = scmp.ne.s32.totalorder %s98, %s99
      %p113 = scmp.eq.s32.totalorder %s23, 1
      %p114 = por %p112, %p113
      %p116 = scmp.ne.s32.totalorder %s99, %s115
      %p117 = scmp.eq.s32.totalorder %s23, 0
      %p118 = por %p116, %p117
      %p119 = scmp.le.s32.totalorder 1, %s17
      %p120 = scmp.lt.s32.totalorder %s17, 3
      %p121 = pnand %p119, %p120
      %p122 = pneg %p121
      // Predicated region
      $region9: #{tpu_custom_call.1} parent=5 // pred_check
        _
      $region10: #{tpu_custom_call.1} parent=5 // pred_check_branch
        %124 = sbr.rel (%p121) target = $region12
      $region11: #{tpu_custom_call.1} parent=5 // pred_region
        %s125 = ssub.s32 %s17, 1
      $region12: #{tpu_custom_call.1} parent=5 // pred_fallthru
        _
      %p126 = scmp.lt.s32.totalorder %s17, 2
      // Predicated region
      $region13: #{tpu_custom_call.1} parent=5 // pred_check
        %p127 = pneg %p126
      $region14: #{tpu_custom_call.1} parent=5 // pred_check_branch
        %129 = sbr.rel (%p127) target = $region16
      $region15: #{tpu_custom_call.1} parent=5 // pred_region
        // Predicated region
        $region17: #{tpu_custom_call.1} parent=15 // pred_check
          %p130 = pneg %p51
        $region18: #{tpu_custom_call.1} parent=15 // pred_check_branch
          %132 = sbr.rel (%p130) target = $region20
        $region19: #{tpu_custom_call.1} parent=15 // pred_region
          %s133 = sand.u32 %s41, 1
          %s134 = scalar_lea.sflag [#allocation5], %s133
          %s135 = sand.u32 %s41, 1
          %s136 = smul.addr %s135, 8
          %s137 = scalar_lea.vmem [#allocation4], %s136
          %s139 = ssub.s32 128, 128
          %140 = vsyncadd %s134, %s139
          %s141 = sadd.s32 %s25, %s24
          %s142 = smul.addr %s141, 128
          %s143 = scalar_lea.hbm %s0, %s142
          %s145 = sshll.u32 %s137, 4
          %s146 = int_to_ptr.vmem [resolvable:$true] %s145
          %148 = dma.hbm_to_vmem [thread:$0]  %s143, 128, %s146, %s134
        $region20: #{tpu_custom_call.1} parent=15 // pred_fallthru
          _
        // Predicated region
        $region21: #{tpu_custom_call.1} parent=15 // pred_check
          %p149 = pneg %p79
        $region22: #{tpu_custom_call.1} parent=15 // pred_check_branch
          %151 = sbr.rel (%p149) target = $region24
        $region23: #{tpu_custom_call.1} parent=15 // pred_region
          %s152 = sand.u32 %s69, 1
          %s153 = scalar_lea.sflag [#allocation8], %s152
          %s154 = sand.u32 %s69, 1
          %s155 = smul.addr %s154, 8
          %s156 = scalar_lea.vmem [#allocation7], %s155
          %s158 = ssub.s32 128, 128
          %159 = vsyncadd %s153, %s158
          %s160 = sadd.s32 %s25, %s24
          %s161 = smul.addr %s160, 128
          %s162 = scalar_lea.hbm %s1, %s161
          %s164 = sshll.u32 %s156, 4
          %s165 = int_to_ptr.vmem [resolvable:$true] %s164
          %167 = dma.hbm_to_vmem [thread:$0]  %s162, 128, %s165, %s153
        $region24: #{tpu_custom_call.1} parent=15 // pred_fallthru
          _
      $region16: #{tpu_custom_call.1} parent=5 // pred_fallthru
        _
      %p168 = scmp.le.s32.totalorder 1, %s17
      %p169 = scmp.lt.s32.totalorder %s17, 3
      %p170 = pnand %p168, %p169
      %p171 = pneg %p170
      // Predicated region
      $region25: #{tpu_custom_call.1} parent=5 // pred_check
        _
      $region26: #{tpu_custom_call.1} parent=5 // pred_check_branch
        %173 = sbr.rel (%p170) target = $region28
      $region27: #{tpu_custom_call.1} parent=5 // pred_region
        %s174 = ssub.s32 %s17, 1
        %s175 = sand.u32 %s44, 1
        %s176 = scalar_lea.sflag [#allocation5], %s175
        %s177 = sand.u32 %s44, 1
        %s178 = smul.addr %s177, 8
        %s179 = scalar_lea.vmem [#allocation4], %s178
        // Predicated region
        $region29: #{tpu_custom_call.1} parent=27 // pred_check
          %p180 = pneg %p57
        $region30: #{tpu_custom_call.1} parent=27 // pred_check_branch
          %182 = sbr.rel (%p180) target = $region32
        $region31: #{tpu_custom_call.1} parent=27 // pred_region
          %183 = dma.done %s176, 128
        $region32: #{tpu_custom_call.1} parent=27 // pred_fallthru
          _
        %s184 = sand.u32 %s72, 1
        %s185 = scalar_lea.sflag [#allocation8], %s184
        %s186 = sand.u32 %s72, 1
        %s187 = smul.addr %s186, 8
        %s188 = scalar_lea.vmem [#allocation7], %s187
        // Predicated region
        $region33: #{tpu_custom_call.1} parent=27 // pred_check
          %p189 = pneg %p85
        $region34: #{tpu_custom_call.1} parent=27 // pred_check_branch
          %191 = sbr.rel (%p189) target = $region36
        $region35: #{tpu_custom_call.1} parent=27 // pred_region
          %192 = dma.done %s185, 128
        $region36: #{tpu_custom_call.1} parent=27 // pred_fallthru
          _
        %s193 = sand.u32 %s44, 1
        %s194 = scalar_lea.sflag [#allocation5], %s193
        %s195 = sand.u32 %s44, 1
        %s196 = smul.addr %s195, 8
        %s197 = scalar_lea.vmem [#allocation4], %s196
        %p198 = pneg %p57
        %p199 = pneg %p54
        %s200 = sand.u32 %s72, 1
        %s201 = scalar_lea.sflag [#allocation8], %s200
        %s202 = sand.u32 %s72, 1
        %s203 = smul.addr %s202, 8
        %s204 = scalar_lea.vmem [#allocation7], %s203
        %p205 = pneg %p85
        %p206 = pneg %p82
        %p207 = pneg %p111
        %p208 = pneg %p108
        %s209 = sand.u32 %s98, 1
        %s210 = scalar_lea.sflag [#allocation6], %s209
        %s211 = sand.u32 %s98, 1
        %s212 = scalar_lea.vmem [#allocation9], %s211
        %p213 = scmp.eq.s32.totalorder %s27, 0
        // Predicated region
        $region37: #{tpu_custom_call.1} parent=27 // pred_check
          %p214 = pneg %p213
        $region38: #{tpu_custom_call.1} parent=27 // pred_check_branch
          %216 = sbr.rel (%p214) target = $region40
        $region39: #{tpu_custom_call.1} parent=27 // pred_region
          %217 = vst [vmem:[#allocation2] sm:$0xff] 0.0
          %218 = vst [vmem:[#allocation3] sm:$0xff] 0.0
        $region40: #{tpu_custom_call.1} parent=27 // pred_fallthru
          _
        %v219 = vld [vmem:[%s179] sm:$0xff]
        %v220 = vld [vmem:[%s188] sm:$0xff]
        %v221 = vsub.f32 0.0, %v219
        %v222 = vmul.f32 %v221, 1.442695
        %v223 = vpow.pop %v222
        %v224 = vadd.f32 %v223, 1.0
        %v225 = vrcp.pop %v224
        %v226 = vmul.f32 1.0, %v225
        %v227 = vld [vmem:[#allocation2] sm:$0xff]
        %v228 = vmul.f32 %v226, %v220
        %v229 = vadd.f32 %v228, 0.0
        %v230 = vadd.f32 %v227, %v229
        %231 = vst [vmem:[#allocation2] sm:$0xff] %v230
        %v232 = vld [vmem:[#allocation3] sm:$0xff]
        %v233 = vadd.f32 %v226, %v220
        %v234 = vadd.f32 %v233, 0.0
        %v235 = vadd.f32 %v232, %v234
        %236 = vst [vmem:[#allocation3] sm:$0xff] %v235
        // Predicated region
        $region41: #{tpu_custom_call.1} parent=27 // pred_check
          %p237 = pneg %p213
        $region42: #{tpu_custom_call.1} parent=27 // pred_check_branch
          %239 = sbr.rel (%p237) target = $region44
        $region43: #{tpu_custom_call.1} parent=27 // pred_region
          %v240 = vld [vmem:[#allocation2] sm:$0xff]
          %241 = vadd.xlane.f32.xlu0 %v240
          %v242 = vpop.xlane.xlu0 %241
          %v243 = vrot.slane %v242, 4
          %v244 = vadd.f32 %v242, %v243
          %v245 = vrot.slane %v244, 2
          %v246 = vadd.f32 %v244, %v245
          %v247 = vrot.slane %v246, 1
          %v248 = vadd.f32 %v246, %v247
          %s249 = vtos %v248
          %v250 = vld [vmem:[#allocation3] sm:$0xff]
          %251 = vadd.xlane.f32.xlu0 %v250
          %v252 = vpop.xlane.xlu0 %251
          %v253 = vrot.slane %v252, 4
          %v254 = vadd.f32 %v252, %v253
          %v255 = vrot.slane %v254, 2
          %v256 = vadd.f32 %v254, %v255
          %v257 = vrot.slane %v256, 1
          %v258 = vadd.f32 %v256, %v257
          %s259 = vtos %v258
          %s260 = smul.f32 %s249, 2.0
          %s261 = sadd.f32 %s260, 1.0
          %s262 = sadd.f32 %s259, 1.0
          %v263 = vstv %s262
          %v264 = vrcp.pop %v263
          %s265 = vtos %v264
          %s266 = smul.f32 %s261, %s265
          %s267 = ssub.f32 1.0, %s266
          %v268 = vstv %s267
          %269 = vst [vmem:[%s212] sm:$0x1] %v268
        $region44: #{tpu_custom_call.1} parent=27 // pred_fallthru
          _
        %s270 = sand.u32 %s98, 1
        %s271 = scalar_lea.sflag [#allocation6], %s270
        %s272 = sand.u32 %s98, 1
        %s273 = scalar_lea.vmem [#allocation9], %s272
        // Predicated region
        $region45: #{tpu_custom_call.1} parent=27 // pred_check
          %p274 = pneg %p108
        $region46: #{tpu_custom_call.1} parent=27 // pred_check_branch
          %276 = sbr.rel (%p274) target = $region48
        $region47: #{tpu_custom_call.1} parent=27 // pred_region
          %s278 = ssub.s32 16, 16
          %279 = vsyncadd %s271, %s278
          %s280 = smul.addr %s26, 16
          %s281 = scalar_lea.hbm %s2, %s280
          %s283 = sshll.u32 %s273, 4
          %s284 = int_to_ptr.vmem [resolvable:$true] %s283
          %286 = dma.vmem_to_hbm [thread:$0]  %s284, 16, %s281, %s271
        $region48: #{tpu_custom_call.1} parent=27 // pred_fallthru
          _
      $region28: #{tpu_custom_call.1} parent=5 // pred_fallthru
        _
      %p287 = scmp.le.s32.totalorder 2, %s17
      // Predicated region
      $region49: #{tpu_custom_call.1} parent=5 // pred_check
        %p288 = pneg %p287
      $region50: #{tpu_custom_call.1} parent=5 // pred_check_branch
        %290 = sbr.rel (%p288) target = $region52
      $region51: #{tpu_custom_call.1} parent=5 // pred_region
        %s291 = ssub.s32 %s17, 2
        // Predicated region
        $region53: #{tpu_custom_call.1} parent=51 // pred_check
          %p292 = pneg %p114
        $region54: #{tpu_custom_call.1} parent=51 // pred_check_branch
          %294 = sbr.rel (%p292) target = $region56
        $region55: #{tpu_custom_call.1} parent=51 // pred_region
          %s295 = sand.u32 %s99, 1
          %s296 = scalar_lea.sflag [#allocation6], %s295
          %s297 = sand.u32 %s99, 1
          %s298 = scalar_lea.vmem [#allocation9], %s297
          %299 = dma.done %s296, 16
        $region56: #{tpu_custom_call.1} parent=51 // pred_fallthru
          _
      $region52: #{tpu_custom_call.1} parent=5 // pred_fallthru
        _
    $region6: #{tpu_custom_call.1} parent=1 // loop_footer
      %s21 = sadd.s32 1, %s17
    $region7: #{tpu_custom_call.1} parent=1 // loop_footer_branch
      %16 = sbr.rel target = $region3
    $region8: #{tpu_custom_call.1} parent=1 // loop_exit
      _
    %300 = vsyncpa [#allocation5], 1
    %s301 = scalar_lea.sflag [#allocation5], 1
    %302 = vsyncpa %s301, 1
    %303 = vsyncpa [#allocation8], 1
    %s304 = scalar_lea.sflag [#allocation8], 1
    %305 = vsyncpa %s304, 1
    %306 = vsyncpa [#allocation6], 1
    %s307 = scalar_lea.sflag [#allocation6], 1
    %308 = vsyncpa %s307, 1

</llo_original>
